<compile_context>
chip_gen: v5e
topology: v5e:2x2
jax: 0.10.0
libtpu: 0.0.40
codegen_flags: <defaults>
</compile_context>

<pallas_src>
import jax
import jax.numpy as jnp
from jax.experimental import pallas as pl
from jax.experimental.pallas import tpu as pltpu


def _mlp_kernel(x_ref, guw_ref, dw_ref, o_ref, acc_ref):
    # x_ref:   (tm, H)        token tile, VMEM-resident across the reduction
    # guw_ref: (1, H, 2*ti)   fused [gate | up] weight tile (contiguous DMA)
    # dw_ref:  (ti, H)        down projection tile
    # o_ref:   (tm, H)        output tile (written on last reduction step)
    # acc_ref: (tm, H)        f32 accumulator scratch
    j = pl.program_id(1)

    @pl.when(j == 0)
    def _init():
        acc_ref[...] = jnp.zeros_like(acc_ref)

    ti = guw_ref.shape[-1] // 2
    x = x_ref[...]

    # Single fused gate+up MXU pass: (tm, H) x (H, 2*ti) -> (tm, 2*ti).
    gu = jnp.dot(x, guw_ref[0], preferred_element_type=jnp.float32)
    g = gu[:, :ti]
    u = gu[:, ti:]

    # SiLU(g) * u in f32; reciprocal on the EUP slot (approx -> vrcp).
    h = g * pl.reciprocal(1.0 + jnp.exp(-g), approx=True) * u

    acc_ref[...] += jnp.dot(h.astype(dw_ref.dtype), dw_ref[...],
                            preferred_element_type=jnp.float32)

    @pl.when(j == pl.num_programs(1) - 1)
    def _finalize():
        o_ref[...] = acc_ref[...].astype(o_ref.dtype)


def _round_up(n, m):
    return ((n + m - 1) // m) * m


def _select_tiles(M, H, I, x_isz, w_isz, tm, ti, vmem_limit_bytes):
    """Per-generation tile selection so the working set fits VMEM."""
    try:
        vmem_cap = int(pltpu.get_tpu_info().vmem_capacity_bytes)
    except Exception:
        vmem_cap = 64 << 20  # conservative fallback: v7x per-TensorCore VMEM

    if vmem_limit_bytes is None:
        vmem_limit_bytes = int(vmem_cap * 0.85)
    budget = int(min(vmem_cap * 0.8, vmem_limit_bytes * 0.95))

    if tm is None:
        # Need tm >= peak_flops / HBM_BW to be MXU-bound:
        # ~650 on v6e, ~310 on v7x, ~240 on v5e.
        tm = 1024 if vmem_cap >= (96 << 20) else 512
    if ti is None:
        ti = 512

    def footprint(tm_, ti_):
        return (4 * tm_ * H * x_isz        # x + out tiles, double-buffered
                + tm_ * H * 4              # f32 accumulator scratch
                + 6 * H * ti_ * w_isz      # fused gate|up (dbuf) + down (dbuf)
                + 3 * tm_ * ti_ * 4)       # f32 intermediates (gu, h)

    # Shrink ti first (per-step overhead / acc RMW traffic), tm is the
    # roofline lever and is sacrificed last.
    while footprint(tm, ti) > budget and ti > 256:
        ti //= 2
    while footprint(tm, ti) > budget and tm > 256:
        tm //= 2

    # Small-problem clamps: a block equal to the full dim is always legal.
    tm = min(tm, M)
    ti = min(ti, I)
    return tm, ti, vmem_limit_bytes


def _pack_weights(gate_w, up_w, down_w, ti):
    """Fuse gate|up into contiguous (grid_i, H, 2*ti) tiles; pad I to ti.

    NOTE: in a real model this repack is done ONCE at weight-load time, not
    per forward call.
    """
    H, I = gate_w.shape
    I_pad = _round_up(I, ti)
    if I_pad != I:
        gate_w = jnp.pad(gate_w, ((0, 0), (0, I_pad - I)))
        up_w = jnp.pad(up_w, ((0, 0), (0, I_pad - I)))
        down_w = jnp.pad(down_w, ((0, I_pad - I), (0, 0)))
    grid_i = I_pad // ti
    g_t = gate_w.reshape(H, grid_i, ti).transpose(1, 0, 2)   # (grid_i, H, ti)
    u_t = up_w.reshape(H, grid_i, ti).transpose(1, 0, 2)     # (grid_i, H, ti)
    gu_w = jnp.concatenate([g_t, u_t], axis=-1)              # (grid_i, H, 2*ti)
    return gu_w, down_w, grid_i


def llama_mlp(x, gate_w, up_w, down_w, *, tm=None, ti=None,
              vmem_limit_bytes=None):
    """x: (B, S, H) -> (B, S, H).  gate_w/up_w: (H, I), down_w: (I, H)."""
    # TODO(synk): config.mlp_bias=True (bias adds) not implemented; Llama default is False.
    B, S, H = x.shape
    Hg, I = gate_w.shape
    assert Hg == H and up_w.shape == (H, I) and down_w.shape == (I, H)

    M = B * S
    x2 = x.reshape(M, H)

    x_isz = jnp.dtype(x.dtype).itemsize
    w_isz = jnp.dtype(gate_w.dtype).itemsize
    tm, ti, vmem_limit_bytes = _select_tiles(M, H, I, x_isz, w_isz,
                                             tm, ti, vmem_limit_bytes)

    gu_w, down_wp, grid_i = _pack_weights(gate_w, up_w, down_w, ti)
    grid_m = pl.cdiv(M, tm)   # ragged M: Pallas masks the partial last block

    # TODO(synk): v7x decode (grid_m == 1): split the I reduction across the
    # two TensorCores (CORE_PARALLEL + VMEM_SHARED partial accumulators) so
    # both cores' DMA engines stream half the weights each.

    cost = pl.CostEstimate(
        flops=6 * M * H * I,                       # two H->I GEMMs + one I->H
        transcendentals=2 * M * I,                 # exp + reciprocal
        bytes_accessed=(2 * M * H * x_isz          # x read + out write
                        + grid_m * 3 * H * grid_i * ti * w_isz),  # weights/M-tile
    )

    out2 = pl.pallas_call(
        _mlp_kernel,
        out_shape=jax.ShapeDtypeStruct((M, H), x.dtype),
        grid_spec=pltpu.PrefetchScalarGridSpec(
            num_scalar_prefetch=0,
            grid=(grid_m, grid_i),
            in_specs=[
                pl.BlockSpec((tm, H), lambda i, j: (i, 0)),          # x (resident over j)
                pl.BlockSpec((1, H, 2 * ti), lambda i, j: (j, 0, 0)),  # fused gate|up tile
                pl.BlockSpec((ti, H), lambda i, j: (j, 0)),          # down tile
            ],
            out_specs=pl.BlockSpec((tm, H), lambda i, j: (i, 0)),
            scratch_shapes=[pltpu.VMEM((tm, H), jnp.float32)],
        ),
        compiler_params=pltpu.CompilerParams(
            dimension_semantics=("parallel", "arbitrary"),
            vmem_limit_bytes=vmem_limit_bytes,
        ),
        cost_estimate=cost,
    )(x2, gu_w, down_wp)

    return out2.reshape(B, S, H)


if __name__ == "__main__":
    key = jax.random.PRNGKey(0)
    k = jax.random.split(key, 8)

    # --- Test 1: small shapes (batch=2, seq=8, hidden=32, intermediate=128).
    B, S, H, I = 2, 8, 32, 128
    x = jax.random.normal(k[0], (B, S, H), dtype=jnp.float32)
    gate_w = jax.random.normal(k[1], (H, I), dtype=jnp.float32) * 0.05
    up_w = jax.random.normal(k[2], (H, I), dtype=jnp.float32) * 0.05
    down_w = jax.random.normal(k[3], (I, H), dtype=jnp.float32) * 0.05

    out = jax.block_until_ready(llama_mlp(x, gate_w, up_w, down_w))
    ref = (jax.nn.silu(x @ gate_w) * (x @ up_w)) @ down_w
    assert out.shape == (B, S, H)
    assert jnp.allclose(out, ref, atol=2e-3, rtol=2e-3)

    # --- Test 2: ragged M (partial token block masking) + I padded to ti.
    B2, S2, H2, I2 = 1, 600, 128, 384
    x2 = jax.random.normal(k[4], (B2, S2, H2), dtype=jnp.float32)
    gw2 = jax.random.normal(k[5], (H2, I2), dtype=jnp.float32) * 0.05
    uw2 = jax.random.normal(k[6], (H2, I2), dtype=jnp.float32) * 0.05
    dw2 = jax.random.normal(k[7], (I2, H2), dtype=jnp.float32) * 0.05

    out2 = jax.block_until_ready(llama_mlp(x2, gw2, uw2, dw2, tm=256, ti=256))
    ref2 = (jax.nn.silu(x2 @ gw2) * (x2 @ uw2)) @ dw2
    assert out2.shape == (B2, S2, H2)
    assert jnp.allclose(out2, ref2, atol=2e-3, rtol=2e-3)

    print("KERNEL_OK")
</pallas_src>

<mosaic_0001>
module attributes {stable_mosaic.version = 11 : i64} {
  func.func @_mlp_kernel(%arg0: i32, %arg1: i32, %arg2: memref<16x32xf32, #tpu.memory_space<vmem>>, %arg3: memref<1x32x256xf32, #tpu.memory_space<vmem>>, %arg4: memref<128x32xf32, #tpu.memory_space<vmem>>, %arg5: memref<16x32xf32, #tpu.memory_space<vmem>>, %arg6: memref<16x32xf32, #tpu.memory_space<vmem>>) attributes {dimension_semantics = [#tpu.dimension_semantics<parallel>, #tpu.dimension_semantics<arbitrary>], iteration_bounds = array<i64: 1, 1>, scalar_prefetch = 0 : i64, scratch_operands = 1 : i64, tpu.core_type = #tpu.core_type<tc>, window_params = [{transform_indices = @transform_0, window_bounds = array<i64: 16, 32>}, {transform_indices = @transform_1, window_bounds = array<i64: 1, 32, 256>}, {transform_indices = @transform_2, window_bounds = array<i64: 128, 32>}, {transform_indices = @transform_3, window_bounds = array<i64: 16, 32>}]} {
    %c0_i32 = arith.constant 0 : i32
    %0 = arith.cmpi eq, %arg1, %c0_i32 : i32
    %1 = arith.extui %0 : i1 to i32
    %c0_i32_0 = arith.constant 0 : i32
    %2 = arith.cmpi ne, %1, %c0_i32_0 : i32
    scf.if %2 {
      %cst_16 = arith.constant 0.000000e+00 : f32
      %25 = vector.broadcast %cst_16 : f32 to vector<16x32xf32>
      %c0_17 = arith.constant 0 : index
      %c0_18 = arith.constant 0 : index
      %26 = vector.load %arg6[%c0_17, %c0_18] : memref<16x32xf32, #tpu.memory_space<vmem>>, vector<16x32xf32>
      tpu.vector_store %arg6[%c0_17, %c0_18], %25 {strides = array<i32>} : memref<16x32xf32, #tpu.memory_space<vmem>>, vector<16x32xf32>,
    } else {
    }
    %c0 = arith.constant 0 : index
    %c0_1 = arith.constant 0 : index
    %3 = vector.load %arg2[%c0, %c0_1] : memref<16x32xf32, #tpu.memory_space<vmem>>, vector<16x32xf32>
    %c0_2 = arith.constant 0 : index
    %c0_3 = arith.constant 0 : index
    %c0_4 = arith.constant 0 : index
    %4 = vector.load %arg3[%c0_2, %c0_3, %c0_4] : memref<1x32x256xf32, #tpu.memory_space<vmem>>, vector<1x32x256xf32>
    %5 = vector.shape_cast %4 : vector<1x32x256xf32> to vector<32x256xf32>
    %cst = arith.constant dense<0.000000e+00> : vector<16x256xf32>
    %6 = tpu.matmul %3, %5, %cst {dimension_numbers = #tpu.dot_dimension_numbers<[1], [0], [0], [1], [0, 0, 1, 1], [], []>} : vector<16x32xf32>, vector<32x256xf32>, vector<16x256xf32> -> vector<16x256xf32>
    %7 = vector.extract_strided_slice %6 {offsets = [0, 0], sizes = [16, 128], strides = [1, 1]} : vector<16x256xf32> to vector<16x128xf32>
    %8 = vector.extract_strided_slice %6 {offsets = [0, 128], sizes = [16, 128], strides = [1, 1]} : vector<16x256xf32> to vector<16x128xf32>
    %cst_5 = arith.constant 0.000000e+00 : f32
    %9 = vector.broadcast %cst_5 : f32 to vector<16x128xf32>
    %10 = arith.subf %9, %7 : vector<16x128xf32>
    %11 = math.exp %10 : vector<16x128xf32>
    %cst_6 = arith.constant 1.000000e+00 : f32
    %12 = vector.broadcast %cst_6 : f32 to vector<16x128xf32>
    %13 = arith.addf %12, %11 : vector<16x128xf32>
    %14 = tpu.reciprocal %13 {approx = true} : vector<16x128xf32> -> vector<16x128xf32>
    %15 = arith.mulf %7, %14 : vector<16x128xf32>
    %16 = arith.mulf %15, %8 : vector<16x128xf32>
    %c0_7 = arith.constant 0 : index
    %c0_8 = arith.constant 0 : index
    %17 = vector.load %arg6[%c0_7, %c0_8] : memref<16x32xf32, #tpu.memory_space<vmem>>, vector<16x32xf32>
    %c0_9 = arith.constant 0 : index
    %c0_10 = arith.constant 0 : index
    %18 = vector.load %arg4[%c0_9, %c0_10] : memref<128x32xf32, #tpu.memory_space<vmem>>, vector<128x32xf32>
    %cst_11 = arith.constant dense<0.000000e+00> : vector<16x32xf32>
    %19 = tpu.matmul %16, %18, %cst_11 {dimension_numbers = #tpu.dot_dimension_numbers<[1], [0], [0], [1], [0, 0, 1, 1], [], []>} : vector<16x128xf32>, vector<128x32xf32>, vector<16x32xf32> -> vector<16x32xf32>
    %20 = arith.addf %17, %19 : vector<16x32xf32>
    %c0_12 = arith.constant 0 : index
    %c0_13 = arith.constant 0 : index
    %21 = vector.load %arg6[%c0_12, %c0_13] : memref<16x32xf32, #tpu.memory_space<vmem>>, vector<16x32xf32>
    tpu.vector_store %arg6[%c0_12, %c0_13], %20 {strides = array<i32>} : memref<16x32xf32, #tpu.memory_space<vmem>>, vector<16x32xf32>,
    %c0_i32_14 = arith.constant 0 : i32
    %22 = arith.cmpi eq, %arg1, %c0_i32_14 : i32
    %23 = arith.extui %22 : i1 to i32
    %c0_i32_15 = arith.constant 0 : i32
    %24 = arith.cmpi ne, %23, %c0_i32_15 : i32
    scf.if %24 {
      %c0_16 = arith.constant 0 : index
      %c0_17 = arith.constant 0 : index
      %25 = vector.load %arg6[%c0_16, %c0_17] : memref<16x32xf32, #tpu.memory_space<vmem>>, vector<16x32xf32>
      %c0_18 = arith.constant 0 : index
      %c0_19 = arith.constant 0 : index
      %26 = vector.load %arg5[%c0_18, %c0_19] : memref<16x32xf32, #tpu.memory_space<vmem>>, vector<16x32xf32>
      tpu.vector_store %arg5[%c0_18, %c0_19], %25 {strides = array<i32>} : memref<16x32xf32, #tpu.memory_space<vmem>>, vector<16x32xf32>,
    } else {
    }
    return
  }
  func.func @transform_0(%arg0: i32, %arg1: i32) -> (i32, i32) {
    %c0_i32 = arith.constant 0 : i32
    %c0_i32_0 = arith.constant 0 : i32
    return %arg0, %c0_i32 : i32, i32
  }
  func.func @transform_1(%arg0: i32, %arg1: i32) -> (i32, i32, i32) {
    %c0_i32 = arith.constant 0 : i32
    %c0_i32_0 = arith.constant 0 : i32
    %c0_i32_1 = arith.constant 0 : i32
    return %arg1, %c0_i32, %c0_i32_0 : i32, i32, i32
  }
  func.func @transform_2(%arg0: i32, %arg1: i32) -> (i32, i32) {
    %c0_i32 = arith.constant 0 : i32
    %c0_i32_0 = arith.constant 0 : i32
    return %arg1, %c0_i32 : i32, i32
  }
  func.func @transform_3(%arg0: i32, %arg1: i32) -> (i32, i32) {
    %c0_i32 = arith.constant 0 : i32
    %c0_i32_0 = arith.constant 0 : i32
    return %arg0, %c0_i32 : i32, i32
  }
}

</mosaic_0001>

<llo_original>
// kernel: tpu_custom_call.1
$region0: #{tpu_custom_call.1}
  #allocation0 [shape = 'u32[]', space=smem, size = 0x4, offset = 0x4, fixed_abs, tag = 'smem constant byte address 0x4 - core index']
  #allocation1 [shape = 'u32[72,128]{1,0:T(1,128)}', space=vmem, size = 0x9000, scoped, tag = 'internal scratch']
  #allocation2 [shape = 'f32[16,32]{1,0:T(8,128)}', space=vmem, size = 0x2000, scoped, tag = 'scratch operand']
  %s0 = inlined_call_operand.vmem [shape: f32[16,32], index: 0, kind: input, shape index: {}]
  %s1 = inlined_call_operand.vmem [shape: f32[1,32,256], index: 1, kind: input, shape index: {}]
  %s2 = inlined_call_operand.vmem [shape: f32[128,32], index: 2, kind: input, shape index: {}]
  %s3 = inlined_call_operand.hbm [shape: f32[16,32], index: 3, kind: output, shape index: {}]
  %s4 = sld [smem:[#allocation0]]
  $region30: #{tpu_custom_call.1} parent=0
    _
  %s6 = ssub.s32 1, %s4
  %s7 = scalar_select 0, %s6, %s4
  $region1: #{tpu_custom_call.1} parent=0
    #allocation3 [shape = 'u8[8192]{0}', space=vmem, size = 0x2000, scoped, tag = 'output window, operand 0, single buffered']
    #allocation4 [shape = 's32[1]{0}', space=sflag, size = 0x4, scoped, tag = 'scoped memory for tpu_custom_call.1']
    %8 = vsyncpa [#allocation4], 0
    // Predicated region
    $region2: #{tpu_custom_call.1} parent=1 // pred_check
      _
    $region3: #{tpu_custom_call.1} parent=1 // pred_check_branch
      %10 = sbr.rel (0) target = $region5
    $region4: #{tpu_custom_call.1} parent=1 // pred_region
      _
    $region5: #{tpu_custom_call.1} parent=1 // pred_fallthru
      _
    // Predicated region
    $region6: #{tpu_custom_call.1} parent=1 // pred_check
      _
    $region7: #{tpu_custom_call.1} parent=1 // pred_check_branch
      %12 = sbr.rel (0) target = $region9
    $region8: #{tpu_custom_call.1} parent=1 // pred_region
      _
    $region9: #{tpu_custom_call.1} parent=1 // pred_fallthru
      _
    // Predicated region
    $region10: #{tpu_custom_call.1} parent=1 // pred_check
      _
    $region11: #{tpu_custom_call.1} parent=1 // pred_check_branch
      %14 = sbr.rel (0) target = $region13
    $region12: #{tpu_custom_call.1} parent=1 // pred_region
      _
    $region13: #{tpu_custom_call.1} parent=1 // pred_fallthru
      _
    %p15 = scmp.eq.s32.totalorder 0, 0
    // Predicated region
    $region14: #{tpu_custom_call.1} parent=1 // pred_check
      %p16 = pneg %p15
    $region15: #{tpu_custom_call.1} parent=1 // pred_check_branch
      %18 = sbr.rel (%p16) target = $region17
    $region16: #{tpu_custom_call.1} parent=1 // pred_region
      %vm19 = vcmask 261120
      %20 = vst.msk [vmem:[#allocation2] sm:$0xff] %vm19, 0.0
      %21 = vst.msk [vmem:[#allocation2 + $0x8] sm:$0xff] %vm19, 0.0
    $region17: #{tpu_custom_call.1} parent=1 // pred_fallthru
      _
    %v22 = vld [vmem:[%s0] sm:$0xff]
    %v23 = vld [vmem:[%s0 + $0x8] sm:$0xff]
    %v24 = vld [vmem:[%s1] sm:$0xff]
    %v25 = vld [vmem:[%s1 + $0x8] sm:$0xff]
    %v26 = vld [vmem:[%s1 + $0x10] sm:$0xff]
    %v27 = vld [vmem:[%s1 + $0x18] sm:$0xff]
    %v28 = vld [vmem:[%s1 + $0x20] sm:$0xff]
    %v29 = vld [vmem:[%s1 + $0x28] sm:$0xff]
    %v30 = vld [vmem:[%s1 + $0x30] sm:$0xff]
    %v31 = vld [vmem:[%s1 + $0x38] sm:$0xff]
    %vm32 = vcmask 261120
    %v34 = vsel %vm32, %v22, 0
    %v37 = vsel %vm32, %v23, 0
    %39 = vmatpush.msra.mxu0 0.0
    %40 = vmatpush.msra.mxu0 0.0
    %41 = vmatpush.msra.mxu0 0.0
    %42 = vmatpush.msra.mxu0 0.0
    %43 = vmatpush.msra.mxu0 0.0
    %44 = vmatpush.msra.mxu0 0.0
    %45 = vmatpush.msra.mxu0 0.0
    %46 = vmatpush.msra.mxu0 0.0
    %47 = vmatpush.msra.mxu0 0.0
    %48 = vmatpush.msra.mxu0 0.0
    %49 = vmatpush.msra.mxu0 0.0
    %50 = vmatpush.msra.mxu0 0.0
    %51 = vmatpush.msra.mxu0 %v30
    %52 = vmatpush.msra.mxu0 %v28
    %53 = vmatpush.msra.mxu0 %v26
    %54 = vmatpush.msra.mxu0 %v24
    %55 = vmatmul.f32.gmra.mxu0 %v34
    %v56 = vpop.f32.mrf.mxu0
    %v57 = vadd.f32 0.0, %v56
    %58 = vmatmul.f32.gmra.mxu0 %v37
    %v59 = vpop.f32.mrf.mxu0
    %v60 = vadd.f32 0.0, %v59
    %61 = vdwg.mxu0
    %62 = vmatpush.msra.mxu0 0.0
    %63 = vmatpush.msra.mxu0 0.0
    %64 = vmatpush.msra.mxu0 0.0
    %65 = vmatpush.msra.mxu0 0.0
    %66 = vmatpush.msra.mxu0 0.0
    %67 = vmatpush.msra.mxu0 0.0
    %68 = vmatpush.msra.mxu0 0.0
    %69 = vmatpush.msra.mxu0 0.0
    %70 = vmatpush.msra.mxu0 0.0
    %71 = vmatpush.msra.mxu0 0.0
    %72 = vmatpush.msra.mxu0 0.0
    %73 = vmatpush.msra.mxu0 0.0
    %74 = vmatpush.msra.mxu0 %v31
    %75 = vmatpush.msra.mxu0 %v29
    %76 = vmatpush.msra.mxu0 %v27
    %77 = vmatpush.msra.mxu0 %v25
    %78 = vmatmul.f32.gmra.mxu0 %v34
    %v79 = vpop.f32.mrf.mxu0
    %v80 = vadd.f32 0.0, %v79
    %81 = vmatmul.f32.gmra.mxu0 %v37
    %v82 = vpop.f32.mrf.mxu0
    %v83 = vadd.f32 0.0, %v82
    %84 = vdwg.mxu0
    %v85 = vsub.f32 0.0, %v57
    %v86 = vsub.f32 0.0, %v60
    %v87 = vmul.f32 %v85, 1.442695
    %v88 = vpow.pop %v87
    %v89 = vmul.f32 %v86, 1.442695
    %v90 = vpow.pop %v89
    %v91 = vadd.f32 %v88, 1.0
    %v92 = vadd.f32 %v90, 1.0
    %v93 = vrcp.pop %v91
    %v94 = vrcp.pop %v92
    %v95 = vmul.f32 %v57, %v93
    %v96 = vmul.f32 %v60, %v94
    %v97 = vmul.f32 %v95, %v80
    %v98 = vmul.f32 %v96, %v83
    %v99 = vld [vmem:[#allocation2] sm:$0xff]
    %v100 = vld [vmem:[#allocation2 + $0x8] sm:$0xff]
    %v101 = vld [vmem:[%s2] sm:$0xff]
    %v102 = vld [vmem:[%s2 + $0x8] sm:$0xff]
    %v103 = vld [vmem:[%s2 + $0x10] sm:$0xff]
    %v104 = vld [vmem:[%s2 + $0x18] sm:$0xff]
    %v105 = vld [vmem:[%s2 + $0x20] sm:$0xff]
    %v106 = vld [vmem:[%s2 + $0x28] sm:$0xff]
    %v107 = vld [vmem:[%s2 + $0x30] sm:$0xff]
    %v108 = vld [vmem:[%s2 + $0x38] sm:$0xff]
    %v109 = vld [vmem:[%s2 + $0x40] sm:$0xff]
    %v110 = vld [vmem:[%s2 + $0x48] sm:$0xff]
    %v111 = vld [vmem:[%s2 + $0x50] sm:$0xff]
    %v112 = vld [vmem:[%s2 + $0x58] sm:$0xff]
    %v113 = vld [vmem:[%s2 + $0x60] sm:$0xff]
    %v114 = vld [vmem:[%s2 + $0x68] sm:$0xff]
    %v115 = vld [vmem:[%s2 + $0x70] sm:$0xff]
    %v116 = vld [vmem:[%s2 + $0x78] sm:$0xff]
    %117 = vmatpush.msra.mxu0 %v116
    %118 = vmatpush.msra.mxu0 %v115
    %119 = vmatpush.msra.mxu0 %v114
    %120 = vmatpush.msra.mxu0 %v113
    %121 = vmatpush.msra.mxu0 %v112
    %122 = vmatpush.msra.mxu0 %v111
    %123 = vmatpush.msra.mxu0 %v110
    %124 = vmatpush.msra.mxu0 %v109
    %125 = vmatpush.msra.mxu0 %v108
    %126 = vmatpush.msra.mxu0 %v107
    %127 = vmatpush.msra.mxu0 %v106
    %128 = vmatpush.msra.mxu0 %v105
    %129 = vmatpush.msra.mxu0 %v104
    %130 = vmatpush.msra.mxu0 %v103
    %131 = vmatpush.msra.mxu0 %v102
    %132 = vmatpush.msra.mxu0 %v101
    %133 = vmatmul.f32.gmra.mxu0 %v97
    %v134 = vpop.f32.mrf.mxu0
    %v135 = vadd.f32 0.0, %v134
    %136 = vmatmul.f32.gmra.mxu0 %v98
    %v137 = vpop.f32.mrf.mxu0
    %v138 = vadd.f32 0.0, %v137
    %139 = vdwg.mxu0
    %v140 = vadd.f32 %v99, %v135
    %v141 = vadd.f32 %v100, %v138
    %142 = vst.msk [vmem:[#allocation2] sm:$0xff] %vm32, %v140
    %143 = vst.msk [vmem:[#allocation2 + $0x8] sm:$0xff] %vm32, %v141
    // Predicated region
    $region18: #{tpu_custom_call.1} parent=1 // pred_check
      %p144 = pneg %p15
    $region19: #{tpu_custom_call.1} parent=1 // pred_check_branch
      %146 = sbr.rel (%p144) target = $region21
    $region20: #{tpu_custom_call.1} parent=1 // pred_region
      %v147 = vld [vmem:[#allocation2] sm:$0xff]
      %v148 = vld [vmem:[#allocation2 + $0x8] sm:$0xff]
      %149 = vst.msk [vmem:[#allocation3] sm:$0xff] %vm32, %v147
      %150 = vst.msk [vmem:[#allocation3 + $0x8] sm:$0xff] %vm32, %v148
    $region21: #{tpu_custom_call.1} parent=1 // pred_fallthru
      _
    // Predicated region
    $region22: #{tpu_custom_call.1} parent=1 // pred_check
      _
    $region23: #{tpu_custom_call.1} parent=1 // pred_check_branch
      %152 = sbr.rel (0) target = $region25
    $region24: #{tpu_custom_call.1} parent=1 // pred_region
      %154 = vsyncadd [#allocation4], 0
      %s155 = sshll.u32 [#allocation3], 4
      %s156 = int_to_ptr.vmem [resolvable:$true] %s155
      %s157 = sshll.u32 %s3, 4
      %s158 = int_to_ptr.hbm [resolvable:$true] %s157
      %163 = dma.vmem_to_hbm [thread:$0]  %s156, 256, %s158, [#allocation4], 128, 128, 8
    $region25: #{tpu_custom_call.1} parent=1 // pred_fallthru
      _
    // Predicated region
    $region26: #{tpu_custom_call.1} parent=1 // pred_check
      _
    $region27: #{tpu_custom_call.1} parent=1 // pred_check_branch
      %165 = sbr.rel (0) target = $region29
    $region28: #{tpu_custom_call.1} parent=1 // pred_region
      %167 = dma.done [#allocation4], 256
    $region29: #{tpu_custom_call.1} parent=1 // pred_fallthru
      _
    %168 = vsyncpa [#allocation4], 1

</llo_original>
